<compile_context>
chip_gen: v5e
topology: v5e:2x2
jax: 0.10.0
libtpu: 0.0.40
codegen_flags: <defaults>
</compile_context>

<pallas_src>
import functools

import jax
import jax.numpy as jnp
from jax import lax
from jax.experimental import pallas as pl
from jax.experimental.pallas import tpu as pltpu


def _round_up(x: int, m: int) -> int:
    return ((x + m - 1) // m) * m


def _sb_contrastive_kernel(d1_ref, d2t_ref, same_col_ref, same_row_ref, out_ref,
                           *, margin: float, n: int, tm: int, tn: int,
                           needs_mask: bool):
    """One (TM, TN) tile of the hinge sum, accumulated into a scalar SMEM output.

    d1_ref:       (TM, D)  row tile of descs1 (native dtype)
    d2t_ref:      (D, TN)  col tile of descs2.T (native dtype)
    same_col_ref: (TM, 1)  f32 diag entries for this row tile
    same_row_ref: (1, TN)  f32 diag entries for this col tile
    out_ref:      (1, 1)   f32 scalar accumulator in SMEM
    """
    i = pl.program_id(0)
    j = pl.program_id(1)
    m = jnp.float32(margin)
    zero = jnp.float32(0.0)

    @pl.when((i == 0) & (j == 0))
    def _init():
        out_ref[0, 0] = zero

    # MXU: [TM, D] @ [D, TN] -> f32 (bf16 inputs stay bf16-native on the MXU).
    dists = jnp.dot(d1_ref[...], d2t_ref[...], preferred_element_type=jnp.float32)

    same_col = same_col_ref[...]   # (TM, 1) f32
    same_row = same_row_ref[...]   # (1, TN) f32

    # Fused bidirectional hinge: one traversal of the tile.
    hinge = (jnp.maximum(zero, m - same_col + dists)
             + jnp.maximum(zero, m - same_row + dists))

    if needs_mask:
        # Zero out padded rows/cols (global index >= true N); zero padding alone
        # would contribute spurious max(0, m) terms.
        row_ids = i * tm + lax.broadcasted_iota(jnp.int32, (tm, tn), 0)
        col_ids = j * tn + lax.broadcasted_iota(jnp.int32, (tm, tn), 1)
        hinge = jnp.where((row_ids < n) & (col_ids < n), hinge, zero)

    out_ref[0, 0] += jnp.sum(hinge)

    @pl.when((i == pl.num_programs(0) - 1) & (j == pl.num_programs(1) - 1))
    def _finalize():
        total = out_ref[0, 0] - 2.0 * m * jnp.float32(n)
        out_ref[0, 0] = total / jnp.float32(n * n)


def sb_contrastive_loss(descs1: jax.Array, descs2: jax.Array, margin: float = 2.0,
                        *, block_m: int = 512, block_n: int = 512) -> jax.Array:
    """Pallas TPU implementation of SBContrastiveLoss.forward. Returns a scalar."""
    assert descs1.ndim == 2 and descs2.ndim == 2
    n, d = descs1.shape
    assert descs2.shape == (n, d), "descs1 and descs2 must have identical (N, D) shapes"
    assert block_m % 8 == 0 and block_n % 128 == 0

    # Diagonal of descs1 @ descs2.T computed directly (O(N*D)), kept in f32.
    same = jnp.sum(descs1.astype(jnp.float32) * descs2.astype(jnp.float32), axis=-1)
    same_col = same.reshape(n, 1)
    same_row = same.reshape(1, n)

    # Pre-transpose the RHS once in XLA so each tile matmul is [TM,D] x [D,TN]
    # with the N axis lane-dense.
    d1 = descs1
    d2t = descs2.T  # (D, N)

    # Per-axis tile size: single full-extent tile when N fits in one block,
    # otherwise aligned blocks with zero padding + in-kernel masking.
    if n <= block_m:
        tm, n_rows = n, n
    else:
        tm, n_rows = block_m, _round_up(n, block_m)
    if n <= block_n:
        tn, n_cols = n, n
    else:
        tn, n_cols = block_n, _round_up(n, block_n)
    needs_mask = (n_rows != n) or (n_cols != n)

    if n_rows != n:
        d1 = jnp.pad(d1, ((0, n_rows - n), (0, 0)))
        same_col = jnp.pad(same_col, ((0, n_rows - n), (0, 0)))
    if n_cols != n:
        d2t = jnp.pad(d2t, ((0, 0), (0, n_cols - n)))
        same_row = jnp.pad(same_row, ((0, 0), (0, n_cols - n)))

    grid = (n_rows // tm, n_cols // tn)

    kernel = functools.partial(
        _sb_contrastive_kernel,
        margin=float(margin), n=int(n), tm=int(tm), tn=int(tn),
        needs_mask=bool(needs_mask),
    )

    # VMEM budget: double-buffered input tiles + f32 dists/hinge temporaries.
    itemsize = jnp.dtype(descs1.dtype).itemsize
    est = (2 * (tm * d + d * tn) * itemsize    # double-buffered d1 / d2t tiles
           + 2 * (tm + tn) * 8                 # same_col / same_row tiles
           + tm * tn * 4)                      # f32 dists tile
    vmem_limit = int(min(96 * 1024 * 1024, max(32 * 1024 * 1024, 3 * est)))

    out = pl.pallas_call(
        kernel,
        out_shape=jax.ShapeDtypeStruct((1, 1), jnp.float32),
        grid=grid,
        in_specs=[
            pl.BlockSpec((tm, d), lambda i, j: (i, 0)),   # descs1 row tile
            pl.BlockSpec((d, tn), lambda i, j: (0, j)),   # descs2.T col tile
            pl.BlockSpec((tm, 1), lambda i, j: (i, 0)),   # same (column form)
            pl.BlockSpec((1, tn), lambda i, j: (0, j)),   # same (row form)
        ],
        out_specs=pl.BlockSpec(memory_space=pltpu.SMEM),
        compiler_params=pltpu.CompilerParams(
            dimension_semantics=("arbitrary", "arbitrary"),
            vmem_limit_bytes=vmem_limit,
        ),
    )(d1, d2t, same_col, same_row)
    return out[0, 0]


def _reference_loss(descs1, descs2, margin=2.0):
    """Pure-JAX reference mirroring the PyTorch forward, for validation."""
    dists = descs1.astype(jnp.float32) @ descs2.astype(jnp.float32).T
    same = jnp.diag(dists)
    n = descs1.shape[0]
    l1 = jnp.sum(jnp.maximum(0.0, margin - same[:, None] + dists)) - margin * n
    l2 = jnp.sum(jnp.maximum(0.0, margin - same[None, :] + dists)) - margin * n
    return (l1 + l2) / (n * n)


if __name__ == "__main__":
    key = jax.random.PRNGKey(0)
    k1, k2 = jax.random.split(key)

    # Primary small-shape test: 8 descriptor pairs, hidden dim 32 (single tile).
    N, D = 8, 32
    descs1 = jax.random.normal(k1, (N, D), dtype=jnp.float32)
    descs2 = jax.random.normal(k2, (N, D), dtype=jnp.float32)

    loss = jax.block_until_ready(sb_contrastive_loss(descs1, descs2, margin=2.0))
    ref = _reference_loss(descs1, descs2, margin=2.0)
    assert jnp.allclose(loss, ref, rtol=1e-5, atol=1e-5), (loss, ref)

    # Exercise the multi-tile accumulation + padded/masked edge-tile path by
    # forcing a tiny row block (grid = (3, 1), rows padded 20 -> 24).
    N2, D2 = 20, 64
    k3, k4 = jax.random.split(k2)
    a = jax.random.normal(k3, (N2, D2), dtype=jnp.float32)
    b = jax.random.normal(k4, (N2, D2), dtype=jnp.float32)
    loss2 = jax.block_until_ready(
        sb_contrastive_loss(a, b, margin=2.0, block_m=8, block_n=128))
    ref2 = _reference_loss(a, b, margin=2.0)
    assert jnp.allclose(loss2, ref2, rtol=1e-5, atol=1e-5), (loss2, ref2)

    print("KERNEL_OK")
</pallas_src>

<mosaic_0001>
module attributes {stable_mosaic.version = 11 : i64} {
  func.func @_sb_contrastive_kernel(%arg0: i32, %arg1: i32, %arg2: memref<8x32xf32, #tpu.memory_space<vmem>>, %arg3: memref<32x8xf32, #tpu.memory_space<vmem>>, %arg4: memref<8x1xf32, #tpu.memory_space<vmem>>, %arg5: memref<1x8xf32, #tpu.memory_space<vmem>>, %arg6: memref<1x1xf32, #tpu.memory_space<smem>>) attributes {dimension_semantics = [#tpu.dimension_semantics<arbitrary>, #tpu.dimension_semantics<arbitrary>], iteration_bounds = array<i64: 1, 1>, scalar_prefetch = 0 : i64, scratch_operands = 0 : i64, tpu.core_type = #tpu.core_type<tc>, window_params = [{transform_indices = @transform_0, window_bounds = array<i64: 8, 32>}, {transform_indices = @transform_1, window_bounds = array<i64: 32, 8>}, {transform_indices = @transform_2, window_bounds = array<i64: 8, 1>}, {transform_indices = @transform_3, window_bounds = array<i64: 1, 8>}, {transform_indices = @transform_4, window_bounds = array<i64: 1, 1>}]} {
    %c0_i32 = arith.constant 0 : i32
    %0 = arith.cmpi eq, %arg0, %c0_i32 : i32
    %c0_i32_0 = arith.constant 0 : i32
    %1 = arith.cmpi eq, %arg1, %c0_i32_0 : i32
    %2 = arith.andi %0, %1 : i1
    %3 = arith.extui %2 : i1 to i32
    %cst = arith.constant 0.000000e+00 : f32
    %c0_i32_1 = arith.constant 0 : i32
    %4 = arith.cmpi ne, %3, %c0_i32_1 : i32
    scf.if %4 {
      %c0_23 = arith.constant 0 : index
      %c0_24 = arith.constant 0 : index
      %35 = memref.load %arg6[%c0_23, %c0_24] : memref<1x1xf32, #tpu.memory_space<smem>>
      memref.store %cst, %arg6[%c0_23, %c0_24] : memref<1x1xf32, #tpu.memory_space<smem>>
    } else {
    }
    %c0 = arith.constant 0 : index
    %c0_2 = arith.constant 0 : index
    %5 = vector.load %arg2[%c0, %c0_2] : memref<8x32xf32, #tpu.memory_space<vmem>>, vector<8x32xf32>
    %c0_3 = arith.constant 0 : index
    %c0_4 = arith.constant 0 : index
    %6 = vector.load %arg3[%c0_3, %c0_4] : memref<32x8xf32, #tpu.memory_space<vmem>>, vector<32x8xf32>
    %cst_5 = arith.constant dense<0.000000e+00> : vector<8x8xf32>
    %7 = tpu.matmul %5, %6, %cst_5 {dimension_numbers = #tpu.dot_dimension_numbers<[1], [0], [0], [1], [0, 0, 1, 1], [], []>} : vector<8x32xf32>, vector<32x8xf32>, vector<8x8xf32> -> vector<8x8xf32>
    %c0_6 = arith.constant 0 : index
    %c0_7 = arith.constant 0 : index
    %8 = vector.load %arg4[%c0_6, %c0_7] : memref<8x1xf32, #tpu.memory_space<vmem>>, vector<8x1xf32>
    %c0_8 = arith.constant 0 : index
    %c0_9 = arith.constant 0 : index
    %9 = vector.load %arg5[%c0_8, %c0_9] : memref<1x8xf32, #tpu.memory_space<vmem>>, vector<1x8xf32>
    %cst_10 = arith.constant 2.000000e+00 : f32
    %10 = vector.broadcast %cst_10 : f32 to vector<8x1xf32>
    %11 = arith.subf %10, %8 : vector<8x1xf32>
    %12 = vector.broadcast %11 : vector<8x1xf32> to vector<8x8xf32>
    %13 = arith.addf %12, %7 : vector<8x8xf32>
    %cst_11 = arith.constant 0.000000e+00 : f32
    %14 = vector.broadcast %cst_11 : f32 to vector<8x8xf32>
    %15 = arith.maximumf %14, %13 : vector<8x8xf32>
    %cst_12 = arith.constant 2.000000e+00 : f32
    %16 = vector.broadcast %cst_12 : f32 to vector<1x8xf32>
    %17 = arith.subf %16, %9 : vector<1x8xf32>
    %18 = vector.broadcast %17 : vector<1x8xf32> to vector<8x8xf32>
    %19 = arith.addf %18, %7 : vector<8x8xf32>
    %cst_13 = arith.constant 0.000000e+00 : f32
    %20 = vector.broadcast %cst_13 : f32 to vector<8x8xf32>
    %21 = arith.maximumf %20, %19 : vector<8x8xf32>
    %22 = arith.addf %15, %21 : vector<8x8xf32>
    %c0_14 = arith.constant 0 : index
    %c0_15 = arith.constant 0 : index
    %23 = memref.load %arg6[%c0_14, %c0_15] : memref<1x1xf32, #tpu.memory_space<smem>>
    %24 = vector.shape_cast %22 : vector<8x8xf32> to vector<1x8x8xf32>
    %cst_16 = arith.constant dense<0.000000e+00> : vector<1xf32>
    %25 = vector.multi_reduction <add>, %24, %cst_16 [1, 2] : vector<1x8x8xf32> to vector<1xf32>
    %26 = vector.shape_cast %25 : vector<1xf32> to vector<1x1x1xf32>
    %27 = vector.extract %26[0, 0, 0] : f32 from vector<1x1x1xf32>
    %28 = arith.addf %23, %27 : f32
    %c0_17 = arith.constant 0 : index
    %c0_18 = arith.constant 0 : index
    %29 = memref.load %arg6[%c0_17, %c0_18] : memref<1x1xf32, #tpu.memory_space<smem>>
    memref.store %28, %arg6[%c0_17, %c0_18] : memref<1x1xf32, #tpu.memory_space<smem>>
    %c0_i32_19 = arith.constant 0 : i32
    %30 = arith.cmpi eq, %arg0, %c0_i32_19 : i32
    %c0_i32_20 = arith.constant 0 : i32
    %31 = arith.cmpi eq, %arg1, %c0_i32_20 : i32
    %32 = arith.andi %30, %31 : i1
    %33 = arith.extui %32 : i1 to i32
    %cst_21 = arith.constant 2.000000e+00 : f32
    %c0_i32_22 = arith.constant 0 : i32
    %34 = arith.cmpi ne, %33, %c0_i32_22 : i32
    scf.if %34 {
      %c0_23 = arith.constant 0 : index
      %c0_24 = arith.constant 0 : index
      %35 = memref.load %arg6[%c0_23, %c0_24] : memref<1x1xf32, #tpu.memory_space<smem>>
      %cst_25 = arith.constant 2.000000e+00 : f32
      %36 = arith.mulf %cst_25, %cst_21 : f32
      %cst_26 = arith.constant 8.000000e+00 : f32
      %37 = arith.mulf %36, %cst_26 : f32
      %38 = arith.subf %35, %37 : f32
      %cst_27 = arith.constant 6.400000e+01 : f32
      %39 = arith.divf %38, %cst_27 : f32
      %c0_28 = arith.constant 0 : index
      %c0_29 = arith.constant 0 : index
      %40 = memref.load %arg6[%c0_28, %c0_29] : memref<1x1xf32, #tpu.memory_space<smem>>
      memref.store %39, %arg6[%c0_28, %c0_29] : memref<1x1xf32, #tpu.memory_space<smem>>
    } else {
    }
    return
  }
  func.func @transform_0(%arg0: i32, %arg1: i32) -> (i32, i32) {
    %c0_i32 = arith.constant 0 : i32
    %c0_i32_0 = arith.constant 0 : i32
    return %arg0, %c0_i32 : i32, i32
  }
  func.func @transform_1(%arg0: i32, %arg1: i32) -> (i32, i32) {
    %c0_i32 = arith.constant 0 : i32
    %c0_i32_0 = arith.constant 0 : i32
    return %c0_i32, %arg1 : i32, i32
  }
  func.func @transform_2(%arg0: i32, %arg1: i32) -> (i32, i32) {
    %c0_i32 = arith.constant 0 : i32
    %c0_i32_0 = arith.constant 0 : i32
    return %arg0, %c0_i32 : i32, i32
  }
  func.func @transform_3(%arg0: i32, %arg1: i32) -> (i32, i32) {
    %c0_i32 = arith.constant 0 : i32
    %c0_i32_0 = arith.constant 0 : i32
    return %c0_i32, %arg1 : i32, i32
  }
  func.func @transform_4(%arg0: i32, %arg1: i32) -> (i32, i32) {
    %c0_i32 = arith.constant 0 : i32
    %c0_i32_0 = arith.constant 0 : i32
    %c0_i32_1 = arith.constant 0 : i32
    return %c0_i32, %c0_i32_0 : i32, i32
  }
}

</mosaic_0001>

<llo_original>
// kernel: tpu_custom_call.1
$region0: #{tpu_custom_call.1}
  #allocation0 [shape = 'u32[]', space=smem, size = 0x4, offset = 0x4, fixed_abs, tag = 'smem constant byte address 0x4 - core index']
  #allocation1 [shape = 'u32[72,128]{1,0:T(1,128)}', space=vmem, size = 0x9000, scoped, tag = 'internal scratch']
  %s0 = inlined_call_operand.vmem [shape: f32[8,32], index: 0, kind: input, shape index: {}]
  %s1 = inlined_call_operand.vmem [shape: f32[32,8], index: 1, kind: input, shape index: {}]
  %s2 = inlined_call_operand.vmem [shape: f32[8,1], index: 2, kind: input, shape index: {}]
  %s3 = inlined_call_operand.vmem [shape: f32[1,8], index: 3, kind: input, shape index: {}]
  %s4 = inlined_call_operand.hbm [shape: f32[1,1], index: 4, kind: output, shape index: {}]
  %s5 = sld [smem:[#allocation0]]
  $region34: #{tpu_custom_call.1} parent=0
    _
  %s7 = ssub.s32 1, %s5
  %s8 = scalar_select 0, %s7, %s5
  $region1: #{tpu_custom_call.1} parent=0
    #allocation2 [shape = 'u8[512]{0}', space=smem, size = 0x200, scoped, tag = 'output window, operand 0, single buffered']
    #allocation3 [shape = 's32[1]{0}', space=sflag, size = 0x4, scoped, tag = 'scoped memory for tpu_custom_call.1']
    %9 = vsyncpa [#allocation3], 0
    // Predicated region
    $region2: #{tpu_custom_call.1} parent=1 // pred_check
      _
    $region3: #{tpu_custom_call.1} parent=1 // pred_check_branch
      %11 = sbr.rel (0) target = $region5
    $region4: #{tpu_custom_call.1} parent=1 // pred_region
      _
    $region5: #{tpu_custom_call.1} parent=1 // pred_fallthru
      _
    // Predicated region
    $region6: #{tpu_custom_call.1} parent=1 // pred_check
      _
    $region7: #{tpu_custom_call.1} parent=1 // pred_check_branch
      %13 = sbr.rel (0) target = $region9
    $region8: #{tpu_custom_call.1} parent=1 // pred_region
      _
    $region9: #{tpu_custom_call.1} parent=1 // pred_fallthru
      _
    // Predicated region
    $region10: #{tpu_custom_call.1} parent=1 // pred_check
      _
    $region11: #{tpu_custom_call.1} parent=1 // pred_check_branch
      %15 = sbr.rel (0) target = $region13
    $region12: #{tpu_custom_call.1} parent=1 // pred_region
      _
    $region13: #{tpu_custom_call.1} parent=1 // pred_fallthru
      _
    // Predicated region
    $region14: #{tpu_custom_call.1} parent=1 // pred_check
      _
    $region15: #{tpu_custom_call.1} parent=1 // pred_check_branch
      %17 = sbr.rel (0) target = $region17
    $region16: #{tpu_custom_call.1} parent=1 // pred_region
      _
    $region17: #{tpu_custom_call.1} parent=1 // pred_fallthru
      _
    %p18 = scmp.eq.s32.totalorder 0, 0
    %p19 = scmp.eq.s32.totalorder 0, 0
    %p20 = pnand %p18, %p19
    %p21 = pneg %p20
    // Predicated region
    $region18: #{tpu_custom_call.1} parent=1 // pred_check
      _
    $region19: #{tpu_custom_call.1} parent=1 // pred_check_branch
      %23 = sbr.rel (%p20) target = $region21
    $region20: #{tpu_custom_call.1} parent=1 // pred_region
      %s24 = scalar_lea.smem [#allocation2], 0
      %25 = sst [smem:[%s24]] 0.0
    $region21: #{tpu_custom_call.1} parent=1 // pred_fallthru
      _
    %v26 = vld [vmem:[%s0] sm:$0xff]
    %v27 = vld [vmem:[%s1] sm:$0xff]
    %v28 = vld [vmem:[%s1 + $0x8] sm:$0xff]
    %v29 = vld [vmem:[%s1 + $0x10] sm:$0xff]
    %v30 = vld [vmem:[%s1 + $0x18] sm:$0xff]
    %vm31 = vcmask 261120
    %v33 = vsel %vm31, %v26, 0
    %35 = vmatpush.msra.mxu0 0.0
    %36 = vmatpush.msra.mxu0 0.0
    %37 = vmatpush.msra.mxu0 0.0
    %38 = vmatpush.msra.mxu0 0.0
    %39 = vmatpush.msra.mxu0 0.0
    %40 = vmatpush.msra.mxu0 0.0
    %41 = vmatpush.msra.mxu0 0.0
    %42 = vmatpush.msra.mxu0 0.0
    %43 = vmatpush.msra.mxu0 0.0
    %44 = vmatpush.msra.mxu0 0.0
    %45 = vmatpush.msra.mxu0 0.0
    %46 = vmatpush.msra.mxu0 0.0
    %47 = vmatpush.msra.mxu0 %v30
    %48 = vmatpush.msra.mxu0 %v29
    %49 = vmatpush.msra.mxu0 %v28
    %50 = vmatpush.msra.mxu0 %v27
    %51 = vmatmul.f32.gmra.mxu0 %v33
    %v52 = vpop.f32.mrf.mxu0
    %v53 = vadd.f32 0.0, %v52
    %54 = vdwg.mxu0
    %v55 = vld [vmem:[%s2] sm:$0xff]
    %v56 = vld [vmem:[%s3] sm:$0x1]
    %v57 = vsub.f32 2.0, %v55
    %59 = vset.pattern.permute.xlu0 0
    %60 = vperm.xlu0 %59, %v57
    %v61 = vpop.permute.xlu0 %60
    %v63 = vadd.f32 %v61, %v53
    %v64 = vmax.f32 %v63, 0.0
    %v65 = vsub.f32 2.0, %v56
    %v67 = vperm.slane %v65, 0
    %v69 = vadd.f32 %v67, %v53
    %v70 = vmax.f32 %v69, 0.0
    %v71 = vadd.f32 %v64, %v70
    %s72 = sld [smem:[#allocation2]]
    %vm73 = vcmask 64512
    %v74 = vsel %vm73, %v71, 0.0
    %75 = vadd.xlane.f32.xlu0 %v74
    %v76 = vpop.xlane.xlu0 %75
    %v77 = vrot.slane %v76, 4
    %v78 = vadd.f32 %v76, %v77
    %v79 = vrot.slane %v78, 2
    %v80 = vadd.f32 %v78, %v79
    %v81 = vrot.slane %v80, 1
    %v82 = vadd.f32 %v80, %v81
    %s83 = vtos %v82
    %s84 = sadd.f32 %s72, %s83
    %s85 = scalar_lea.smem [#allocation2], 0
    %86 = sst [smem:[%s85]] %s84
    // Predicated region
    $region22: #{tpu_custom_call.1} parent=1 // pred_check
      _
    $region23: #{tpu_custom_call.1} parent=1 // pred_check_branch
      %88 = sbr.rel (%p20) target = $region25
    $region24: #{tpu_custom_call.1} parent=1 // pred_region
      %s89 = sld [smem:[#allocation2]]
      %s90 = ssub.f32 %s89, 32.0
      %v91 = vrcp.pop 64.0
      %v92 = vmul.f32 64.0, %v91
      %v93 = vsub.f32 1.0, %v92
      %v94 = vmul.f32 %v91, %v93
      %v95 = vadd.f32 %v91, %v94
      %vm96 = vweird.f32 %v91
      %v97 = vsel %vm96, %v91, %v95
      %s98 = vtos %v97
      %s99 = smul.f32 %s90, %s98
      %100 = sst [smem:[%s85]] %s99
    $region25: #{tpu_custom_call.1} parent=1 // pred_fallthru
      _
    // Predicated region
    $region26: #{tpu_custom_call.1} parent=1 // pred_check
      _
    $region27: #{tpu_custom_call.1} parent=1 // pred_check_branch
      %102 = sbr.rel (0) target = $region29
    $region28: #{tpu_custom_call.1} parent=1 // pred_region
      %104 = vsyncadd [#allocation3], 0
      %s106 = sshll.u32 %s4, 4
      %s107 = int_to_ptr.hbm [resolvable:$true] %s106
      %109 = dma.smem_to_hbm [#allocation2], 16, %s107, [#allocation3]
    $region29: #{tpu_custom_call.1} parent=1 // pred_fallthru
      _
    // Predicated region
    $region30: #{tpu_custom_call.1} parent=1 // pred_check
      _
    $region31: #{tpu_custom_call.1} parent=1 // pred_check_branch
      %111 = sbr.rel (0) target = $region33
    $region32: #{tpu_custom_call.1} parent=1 // pred_region
      %113 = dma.done [#allocation3], 16
    $region33: #{tpu_custom_call.1} parent=1 // pred_fallthru
      _
    %114 = sfence
    %115 = vsyncpa [#allocation3], 1

</llo_original>
